<compile_context>
chip_gen: v7x
topology: tpu7x:2x2x1
jax: 0.10.0
libtpu: 0.0.40
codegen_flags: <defaults>
</compile_context>

<pallas_src>
import functools

import jax
import jax.numpy as jnp
from jax.experimental import pallas as pl
from jax.experimental.pallas import tpu as pltpu


# --------------------------------------------------------------------------- #
# Kernel
# --------------------------------------------------------------------------- #
def _ffn_ln_kernel(x_ref, w1_ref, b1_ref, w2_ref, b2_ref, g_ref, beta_ref,
                   o_ref, acc_ref, *, eps, inv_d):
    """One (row-tile i, hidden-chunk k) grid step.

    grid = (num_row_tiles, num_hidden_chunks); the hidden axis is a reduction:
    w1 column-chunks / w2 row-chunks stream through VMEM while an f32
    (tm, d_model) accumulator lives in scratch. The bias + residual + LayerNorm
    epilogue runs once, on the last hidden chunk.
    """
    k = pl.program_id(1)
    nk = pl.num_programs(1)

    @pl.when(k == 0)
    def _():
        acc_ref[...] = jnp.zeros_like(acc_ref)

    x = x_ref[...]

    # w_1 chunk + ReLU: native-dtype operands on the MXU, f32 accumulate.
    h = jnp.dot(x, w1_ref[...], preferred_element_type=jnp.float32)
    h = jnp.maximum(h + b1_ref[...], 0.0)

    # w_2 chunk: feed the MXU in the weights' native dtype (no-op for f32
    # weights; for bf16 weights this is standard mixed-precision behaviour);
    # accumulation stays in f32 in the scratch accumulator.
    acc_ref[...] += jnp.dot(h.astype(w2_ref.dtype), w2_ref[...],
                            preferred_element_type=jnp.float32)

    @pl.when(k == nk - 1)
    def _():
        y = acc_ref[...] + b2_ref[...] + x.astype(jnp.float32)
        # Fused single-pass LayerNorm statistics: var = E[y^2] - E[y]^2
        # (one reduction pass instead of two). Matches
        # torch.nn.LayerNorm(d_model, eps=1e-6): biased variance, eps in rsqrt.
        mean = jnp.sum(y, axis=-1, keepdims=True) * inv_d
        mean_sq = jnp.sum(y * y, axis=-1, keepdims=True) * inv_d
        var = mean_sq - mean * mean
        y_hat = (y - mean) * jax.lax.rsqrt(var + eps)
        o_ref[...] = (y_hat * g_ref[...] + beta_ref[...]).astype(o_ref.dtype)


# --------------------------------------------------------------------------- #
# Capability / hardware queries
# --------------------------------------------------------------------------- #
def _probe_copy_kernel(x_ref, o_ref):
    o_ref[...] = x_ref[...]


@functools.lru_cache(maxsize=None)
def _single_buffer_supported():
    """Explicit capability probe for single-buffered BlockSpecs (pl.Buffered(1)).

    Isolated, cached probe on a trivial copy kernel -- failures of the real FFN
    kernel are never masked by this (it replaces the old blanket try/except).
    """
    if not hasattr(pl, "Buffered"):
        return False
    try:
        fn = pl.pallas_call(
            _probe_copy_kernel,
            out_shape=jax.ShapeDtypeStruct((8, 128), jnp.float32),
            grid=(1,),
            in_specs=[pl.BlockSpec((8, 128), lambda i: (0, 0),
                                   pipeline_mode=pl.Buffered(1))],
            out_specs=pl.BlockSpec((8, 128), lambda i: (0, 0)),
        )
        jax.block_until_ready(fn(jnp.zeros((8, 128), jnp.float32)))
        return True
    except Exception:
        return False


@functools.lru_cache(maxsize=None)
def _usable_vmem_bytes():
    """Generation-aware per-TensorCore VMEM budget (capacity minus headroom)."""
    cap = 64 << 20  # conservative default: v7x has 64 MiB per TensorCore
    try:
        cap = int(getattr(pltpu.get_tpu_info(), "vmem_capacity_bytes", cap))
    except Exception:
        pass  # hardware query unavailable (e.g. interpret mode): keep the default
    # Leave ~1/8 of physical VMEM for Mosaic internal scratch / compiler temps:
    # ~56 MiB on v7x (64 MiB/TC), ~112 MiB on v5e/v6e (128 MiB).
    return (cap * 7) // 8


# --------------------------------------------------------------------------- #
# Tile sizing
# --------------------------------------------------------------------------- #
def _row_granularity(dtype):
    """Sublane packing: 8 rows/vreg for 32-bit, 16 for bf16/fp16, 32 for int8/fp8."""
    return max(8, 32 // jnp.dtype(dtype).itemsize)


def _row_tile_bytes(tm, d_model, x_bytes, out_bytes):
    """VMEM needed per row tile, independent of the hidden-chunk size."""
    return (2 * tm * d_model * (x_bytes + out_bytes)   # x + out tiles, double-buffered
            + tm * d_model * 4                         # f32 accumulator scratch
            + 5 * tm * d_model * 4)                    # f32 epilogue temporaries


def _pick_tm(rows, d_model, x_dtype, out_dtype, usable):
    g = _row_granularity(x_dtype)
    x_b = jnp.dtype(x_dtype).itemsize
    o_b = jnp.dtype(out_dtype).itemsize
    # Bigger row tiles amortize the ~0.35us/step pipeline overhead; allow larger
    # tiles on 128 MiB-VMEM generations (v5e/v6e) than on v7x (64 MiB per TC).
    target = 1024 if usable >= (96 << 20) else 512
    tm = min(target, rows)
    # MXU-friendly rounding: multiples of 256 fill the 256x256 MXU on v6e/v7x
    # (256 is also a multiple of v5e's 128-wide MXU); below that, round up to the
    # dtype's packed-sublane granularity so vregs stay fully populated.
    if tm >= 256:
        tm -= tm % 256
    elif tm >= 128:
        tm -= tm % 128
    else:
        tm = -(-tm // g) * g
    tm = max(tm, g)

    def shrink(t):
        t = t // 2
        return max(g, t - (t % g))

    # Keep the row-tile working set within ~half the budget (weight chunks need
    # the rest), and guarantee >= 2 row tiles so both v7x TensorCores get work.
    while tm > g and _row_tile_bytes(tm, d_model, x_b, o_b) > usable // 2:
        tm = shrink(tm)
    while tm > g and pl.cdiv(rows, tm) < 2:
        tm = shrink(tm)
    return tm


def _pick_tk(d_hidden, d_model, tm, w_dtype, usable, row_bytes):
    w_b = jnp.dtype(w_dtype).itemsize
    avail = max(usable - row_bytes, 0)
    wbuf = 1 if _single_buffer_supported() else 2
    # Fully-resident weights (single hidden step) if they fit the remaining budget.
    full = (wbuf * 2 * d_model * d_hidden * w_b   # w1 + w2
            + wbuf * 8 * d_hidden * 4             # b1 (padded to 8 sublanes)
            + tm * d_hidden * 4)                  # f32 hidden activation
    if full <= avail:
        return d_hidden
    # Otherwise stream the hidden dim: largest multiple-of-128 divisor of
    # d_hidden whose double-buffered w1-column + w2-row chunks (+ f32 hidden
    # chunk) fit the remaining budget.
    per_tk = 4 * d_model * w_b + 4 * tm + 64
    cap = avail // per_tk
    best = 0
    t = 128
    while t <= d_hidden:
        if d_hidden % t == 0 and t <= cap:
            best = t
        t += 128
    if best:
        return best
    # No multiple-of-128 divisor fits: fall back to full residency (the vmem
    # limit is clamped to the usable budget either way).
    # TODO(synk): host-pad d_hidden to a multiple of 128 once for ragged hidden dims.
    return d_hidden


def _vmem_limit(tm, tk, d_model, d_hidden, x_dtype, out_dtype, w_dtype, usable):
    x_b = jnp.dtype(x_dtype).itemsize
    o_b = jnp.dtype(out_dtype).itemsize
    w_b = jnp.dtype(w_dtype).itemsize
    nk = pl.cdiv(d_hidden, tk)
    wbuf = 1 if (nk == 1 and _single_buffer_supported()) else 2
    need = (_row_tile_bytes(tm, d_model, x_b, o_b)
            + wbuf * 2 * d_model * tk * w_b      # w1 column + w2 row chunks
            + wbuf * 8 * tk * 4                  # b1 chunk (sublane padded)
            + 3 * 8 * d_model * 4                # b2 / gamma / beta (sublane padded)
            + tm * tk * 4)                       # f32 hidden chunk
    budget = max(int(need * 1.25) + (4 << 20), 32 << 20)
    return int(min(budget, usable))


# --------------------------------------------------------------------------- #
# pallas_call builder + public wrapper
# --------------------------------------------------------------------------- #
def _build_ffn_call(rows, d_model, d_hidden, tm, tk, out_dtype, eps,
                    vmem_limit, cost):
    nk = pl.cdiv(d_hidden, tk)
    single_ok = _single_buffer_supported()
    resident = nk == 1

    def spec(shape, idx, constant_index):
        # Single-buffer blocks whose index never changes (halves their VMEM
        # footprint); gated on the explicit capability probe above.
        if constant_index and single_ok:
            return pl.BlockSpec(shape, idx, pipeline_mode=pl.Buffered(1))
        return pl.BlockSpec(shape, idx)

    kernel = functools.partial(_ffn_ln_kernel, eps=eps, inv_d=1.0 / d_model)

    return pl.pallas_call(
        kernel,
        out_shape=jax.ShapeDtypeStruct((rows, d_model), out_dtype),
        grid_spec=pltpu.PrefetchScalarGridSpec(
            num_scalar_prefetch=0,
            grid=(pl.cdiv(rows, tm), nk),       # rows parallel, hidden reduction last
            in_specs=[
                pl.BlockSpec((tm, d_model), lambda i, k: (i, 0)),      # x row tile
                spec((d_model, tk), lambda i, k: (0, k), resident),    # w1 column chunk
                spec((1, tk), lambda i, k: (0, k), resident),          # b1 chunk
                spec((tk, d_model), lambda i, k: (k, 0), resident),    # w2 row chunk
                spec((1, d_model), lambda i, k: (0, 0), True),         # b2
                spec((1, d_model), lambda i, k: (0, 0), True),         # gamma
                spec((1, d_model), lambda i, k: (0, 0), True),         # beta
            ],
            out_specs=pl.BlockSpec((tm, d_model), lambda i, k: (i, 0)),
            scratch_shapes=[pltpu.VMEM((tm, d_model), jnp.float32)],
        ),
        compiler_params=pltpu.CompilerParams(
            dimension_semantics=("parallel", "arbitrary"),
            vmem_limit_bytes=vmem_limit),
        cost_estimate=cost,
    )


def poss_feed_forward(x, w1, b1, w2, b2, gamma, beta, *, eps=1e-6, tm=None, tk=None):
    """x: [B, S, d_model] -> [B, S, d_model] (== LayerNorm(w2(relu(w1(x))) + x)).

    Note: for production shapes, d_model / d_hidden should be multiples of 256 on
    v6e/v7x (128 on v5e) for lane-dense stores and full MXU width.
    """
    B, S, d_model = x.shape
    d_hidden = w1.shape[1]
    rows = B * S

    # Flat row view; no host-side padding (a ragged last row tile is handled by
    # Pallas' partial-block masking -- each output row depends only on its own
    # input row -- so there is no extra HBM pad/slice round trip).
    x2d = x.reshape(rows, d_model)

    usable = _usable_vmem_bytes()
    if tm is None:
        tm = _pick_tm(rows, d_model, x.dtype, x.dtype, usable)
    if tk is None:
        tk = _pick_tk(d_hidden, d_model, tm, w1.dtype, usable,
                      _row_tile_bytes(tm, d_model, x.dtype.itemsize,
                                      x.dtype.itemsize))

    # 1-D params as (1, d) f32 so they broadcast in the f32 epilogue.
    b1_2d = b1.reshape(1, d_hidden).astype(jnp.float32)
    b2_2d = b2.reshape(1, d_model).astype(jnp.float32)
    g_2d = gamma.reshape(1, d_model).astype(jnp.float32)
    be_2d = beta.reshape(1, d_model).astype(jnp.float32)

    vmem_limit = _vmem_limit(tm, tk, d_model, d_hidden,
                             x.dtype, x.dtype, w1.dtype, usable)

    x_b = x.dtype.itemsize
    w_b = w1.dtype.itemsize
    cost = pl.CostEstimate(
        flops=4 * rows * d_model * d_hidden,                  # two matmuls
        transcendentals=rows,                                 # one rsqrt per row
        bytes_accessed=int(rows * d_model * 2 * x_b
                           + 2 * d_model * d_hidden * w_b
                           + (d_hidden + 3 * d_model) * 4))

    call = _build_ffn_call(rows, d_model, d_hidden, tm, tk, x.dtype, eps,
                           vmem_limit, cost)
    out2d = call(x2d, w1, b1_2d, w2, b2_2d, g_2d, be_2d)
    return out2d.reshape(B, S, d_model)


# --------------------------------------------------------------------------- #
# Reference + self-test
# --------------------------------------------------------------------------- #
def reference(x, w1, b1, w2, b2, gamma, beta, eps=1e-6):
    """Pure-JAX reference of the PyTorch forward."""
    residual = x
    h = jnp.maximum(x @ w1 + b1, 0.0)
    y = h @ w2 + b2 + residual
    mean = jnp.mean(y, axis=-1, keepdims=True)
    var = jnp.mean(jnp.square(y - mean), axis=-1, keepdims=True)
    return (y - mean) / jnp.sqrt(var + eps) * gamma + beta


if __name__ == "__main__":
    # Small shapes consistent with the module: batch=2, seq=8, d_model=32, d_hidden=64.
    B, S, d_model, d_hidden = 2, 8, 32, 64

    key = jax.random.PRNGKey(0)
    kx, kw1, kb1, kw2, kb2 = jax.random.split(key, 5)

    x = jax.random.normal(kx, (B, S, d_model), dtype=jnp.float32)
    w1 = jax.random.normal(kw1, (d_model, d_hidden), dtype=jnp.float32) * 0.1
    b1 = jax.random.normal(kb1, (d_hidden,), dtype=jnp.float32) * 0.1
    w2 = jax.random.normal(kw2, (d_hidden, d_model), dtype=jnp.float32) * 0.1
    b2 = jax.random.normal(kb2, (d_model,), dtype=jnp.float32) * 0.1
    gamma = jnp.ones((d_model,), dtype=jnp.float32)    # LayerNorm weight init
    beta = jnp.zeros((d_model,), dtype=jnp.float32)    # LayerNorm bias init

    out = poss_feed_forward(x, w1, b1, w2, b2, gamma, beta)
    out = jax.block_until_ready(out)

    ref = reference(x, w1, b1, w2, b2, gamma, beta)
    assert out.shape == (B, S, d_model)
    assert jnp.allclose(out, ref, atol=1e-4, rtol=1e-4), "mismatch vs reference"

    print("KERNEL_OK")
</pallas_src>

<mosaic_0001>
module attributes {stable_mosaic.version = 11 : i64} {
  func.func @_probe_copy_kernel(%arg0: i32, %arg1: memref<8x128xf32, #tpu.memory_space<vmem>>, %arg2: memref<8x128xf32, #tpu.memory_space<vmem>>) attributes {dimension_semantics = [#tpu.dimension_semantics<arbitrary>], iteration_bounds = array<i64: 1>, scalar_prefetch = 0 : i64, scratch_operands = 0 : i64, tpu.core_type = #tpu.core_type<tc>, window_params = [{pipeline_mode = #tpu.pipeline_mode<synchronous>, transform_indices = @transform_0, window_bounds = array<i64: 8, 128>}, {pipeline_mode = #tpu.pipeline_mode<synchronous>, transform_indices = @transform_1, window_bounds = array<i64: 8, 128>}]} {
    %c0 = arith.constant 0 : index
    %c0_0 = arith.constant 0 : index
    %0 = vector.load %arg1[%c0, %c0_0] : memref<8x128xf32, #tpu.memory_space<vmem>>, vector<8x128xf32>
    %c0_1 = arith.constant 0 : index
    %c0_2 = arith.constant 0 : index
    %1 = vector.load %arg2[%c0_1, %c0_2] : memref<8x128xf32, #tpu.memory_space<vmem>>, vector<8x128xf32>
    tpu.vector_store %arg2[%c0_1, %c0_2], %0 {strides = array<i32>} : memref<8x128xf32, #tpu.memory_space<vmem>>, vector<8x128xf32>,
    return
  }
  func.func @transform_0(%arg0: i32) -> (i32, i32) {
    %c0_i32 = arith.constant 0 : i32
    %c0_i32_0 = arith.constant 0 : i32
    %c0_i32_1 = arith.constant 0 : i32
    return %c0_i32, %c0_i32_0 : i32, i32
  }
  func.func @transform_1(%arg0: i32) -> (i32, i32) {
    %c0_i32 = arith.constant 0 : i32
    %c0_i32_0 = arith.constant 0 : i32
    %c0_i32_1 = arith.constant 0 : i32
    return %c0_i32, %c0_i32_0 : i32, i32
  }
}

module attributes {stable_mosaic.version = 11 : i64} {
  func.func @_ffn_ln_kernel(%arg0: i32, %arg1: i32, %arg2: memref<8x32xf32, #tpu.memory_space<vmem>>, %arg3: memref<32x64xf32, #tpu.memory_space<vmem>>, %arg4: memref<1x64xf32, #tpu.memory_space<vmem>>, %arg5: memref<64x32xf32, #tpu.memory_space<vmem>>, %arg6: memref<1x32xf32, #tpu.memory_space<vmem>>, %arg7: memref<1x32xf32, #tpu.memory_space<vmem>>, %arg8: memref<1x32xf32, #tpu.memory_space<vmem>>, %arg9: memref<8x32xf32, #tpu.memory_space<vmem>>, %arg10: memref<8x32xf32, #tpu.memory_space<vmem>>) attributes {dimension_semantics = [#tpu.dimension_semantics<parallel>, #tpu.dimension_semantics<arbitrary>], iteration_bounds = array<i64: 2, 1>, scalar_prefetch = 0 : i64, scratch_operands = 1 : i64, tpu.core_type = #tpu.core_type<tc>, window_params = [{transform_indices = @transform_0, window_bounds = array<i64: 8, 32>}, {transform_indices = @transform_1, window_bounds = array<i64: 32, 64>}, {transform_indices = @transform_2, window_bounds = array<i64: 1, 64>}, {transform_indices = @transform_3, window_bounds = array<i64: 64, 32>}, {pipeline_mode = #tpu.pipeline_mode<synchronous>, transform_indices = @transform_4, window_bounds = array<i64: 1, 32>}, {pipeline_mode = #tpu.pipeline_mode<synchronous>, transform_indices = @transform_5, window_bounds = array<i64: 1, 32>}, {pipeline_mode = #tpu.pipeline_mode<synchronous>, transform_indices = @transform_6, window_bounds = array<i64: 1, 32>}, {transform_indices = @transform_7, window_bounds = array<i64: 8, 32>}]} {
    %c0_i32 = arith.constant 0 : i32
    %0 = arith.cmpi eq, %arg1, %c0_i32 : i32
    %1 = arith.extui %0 : i1 to i32
    %c0_i32_0 = arith.constant 0 : i32
    %2 = arith.cmpi ne, %1, %c0_i32_0 : i32
    scf.if %2 {
      %cst_16 = arith.constant 0.000000e+00 : f32
      %19 = vector.broadcast %cst_16 : f32 to vector<8x32xf32>
      %c0_17 = arith.constant 0 : index
      %c0_18 = arith.constant 0 : index
      %20 = vector.load %arg10[%c0_17, %c0_18] : memref<8x32xf32, #tpu.memory_space<vmem>>, vector<8x32xf32>
      tpu.vector_store %arg10[%c0_17, %c0_18], %19 {strides = array<i32>} : memref<8x32xf32, #tpu.memory_space<vmem>>, vector<8x32xf32>,
    } else {
    }
    %c0 = arith.constant 0 : index
    %c0_1 = arith.constant 0 : index
    %3 = vector.load %arg2[%c0, %c0_1] : memref<8x32xf32, #tpu.memory_space<vmem>>, vector<8x32xf32>
    %c0_2 = arith.constant 0 : index
    %c0_3 = arith.constant 0 : index
    %4 = vector.load %arg3[%c0_2, %c0_3] : memref<32x64xf32, #tpu.memory_space<vmem>>, vector<32x64xf32>
    %cst = arith.constant dense<0.000000e+00> : vector<8x64xf32>
    %5 = tpu.matmul %3, %4, %cst {dimension_numbers = #tpu.dot_dimension_numbers<[1], [0], [0], [1], [0, 0, 1, 1], [], []>} : vector<8x32xf32>, vector<32x64xf32>, vector<8x64xf32> -> vector<8x64xf32>
    %c0_4 = arith.constant 0 : index
    %c0_5 = arith.constant 0 : index
    %6 = vector.load %arg4[%c0_4, %c0_5] : memref<1x64xf32, #tpu.memory_space<vmem>>, vector<1x64xf32>
    %7 = vector.broadcast %6 : vector<1x64xf32> to vector<8x64xf32>
    %8 = arith.addf %5, %7 : vector<8x64xf32>
    %cst_6 = arith.constant 0.000000e+00 : f32
    %9 = vector.broadcast %cst_6 : f32 to vector<8x64xf32>
    %10 = arith.maximumf %8, %9 : vector<8x64xf32>
    %c0_7 = arith.constant 0 : index
    %c0_8 = arith.constant 0 : index
    %11 = vector.load %arg10[%c0_7, %c0_8] : memref<8x32xf32, #tpu.memory_space<vmem>>, vector<8x32xf32>
    %c0_9 = arith.constant 0 : index
    %c0_10 = arith.constant 0 : index
    %12 = vector.load %arg5[%c0_9, %c0_10] : memref<64x32xf32, #tpu.memory_space<vmem>>, vector<64x32xf32>
    %cst_11 = arith.constant dense<0.000000e+00> : vector<8x32xf32>
    %13 = tpu.matmul %10, %12, %cst_11 {dimension_numbers = #tpu.dot_dimension_numbers<[1], [0], [0], [1], [0, 0, 1, 1], [], []>} : vector<8x64xf32>, vector<64x32xf32>, vector<8x32xf32> -> vector<8x32xf32>
    %14 = arith.addf %11, %13 : vector<8x32xf32>
    %c0_12 = arith.constant 0 : index
    %c0_13 = arith.constant 0 : index
    %15 = vector.load %arg10[%c0_12, %c0_13] : memref<8x32xf32, #tpu.memory_space<vmem>>, vector<8x32xf32>
    tpu.vector_store %arg10[%c0_12, %c0_13], %14 {strides = array<i32>} : memref<8x32xf32, #tpu.memory_space<vmem>>, vector<8x32xf32>,
    %c0_i32_14 = arith.constant 0 : i32
    %16 = arith.cmpi eq, %arg1, %c0_i32_14 : i32
    %17 = arith.extui %16 : i1 to i32
    %c0_i32_15 = arith.constant 0 : i32
    %18 = arith.cmpi ne, %17, %c0_i32_15 : i32
    scf.if %18 {
      %c0_16 = arith.constant 0 : index
      %c0_17 = arith.constant 0 : index
      %19 = vector.load %arg10[%c0_16, %c0_17] : memref<8x32xf32, #tpu.memory_space<vmem>>, vector<8x32xf32>
      %c0_18 = arith.constant 0 : index
      %c0_19 = arith.constant 0 : index
      %20 = vector.load %arg6[%c0_18, %c0_19] : memref<1x32xf32, #tpu.memory_space<vmem>>, vector<1x32xf32>
      %21 = vector.broadcast %20 : vector<1x32xf32> to vector<8x32xf32>
      %22 = arith.addf %19, %21 : vector<8x32xf32>
      %23 = arith.addf %22, %3 : vector<8x32xf32>
      %cst_20 = arith.constant dense<0.000000e+00> : vector<8xf32>
      %24 = vector.multi_reduction <add>, %23, %cst_20 [1] : vector<8x32xf32> to vector<8xf32>
      %25 = vector.shape_cast %24 : vector<8xf32> to vector<8x1xf32>
      %cst_21 = arith.constant 3.125000e-02 : f32
      %26 = vector.broadcast %cst_21 : f32 to vector<8x1xf32>
      %27 = arith.mulf %25, %26 : vector<8x1xf32>
      %28 = arith.mulf %23, %23 : vector<8x32xf32>
      %cst_22 = arith.constant dense<0.000000e+00> : vector<8xf32>
      %29 = vector.multi_reduction <add>, %28, %cst_22 [1] : vector<8x32xf32> to vector<8xf32>
      %30 = vector.shape_cast %29 : vector<8xf32> to vector<8x1xf32>
      %cst_23 = arith.constant 3.125000e-02 : f32
      %31 = vector.broadcast %cst_23 : f32 to vector<8x1xf32>
      %32 = arith.mulf %30, %31 : vector<8x1xf32>
      %33 = arith.mulf %27, %27 : vector<8x1xf32>
      %34 = arith.subf %32, %33 : vector<8x1xf32>
      %35 = vector.broadcast %27 : vector<8x1xf32> to vector<8x32xf32>
      %36 = arith.subf %23, %35 : vector<8x32xf32>
      %cst_24 = arith.constant 9.99999997E-7 : f32
      %37 = vector.broadcast %cst_24 : f32 to vector<8x1xf32>
      %38 = arith.addf %34, %37 : vector<8x1xf32>
      %39 = math.rsqrt %38 : vector<8x1xf32>
      %40 = vector.broadcast %39 : vector<8x1xf32> to vector<8x32xf32>
      %41 = arith.mulf %36, %40 : vector<8x32xf32>
      %c0_25 = arith.constant 0 : index
      %c0_26 = arith.constant 0 : index
      %42 = vector.load %arg7[%c0_25, %c0_26] : memref<1x32xf32, #tpu.memory_space<vmem>>, vector<1x32xf32>
      %43 = vector.broadcast %42 : vector<1x32xf32> to vector<8x32xf32>
      %44 = arith.mulf %41, %43 : vector<8x32xf32>
      %c0_27 = arith.constant 0 : index
      %c0_28 = arith.constant 0 : index
      %45 = vector.load %arg8[%c0_27, %c0_28] : memref<1x32xf32, #tpu.memory_space<vmem>>, vector<1x32xf32>
      %46 = vector.broadcast %45 : vector<1x32xf32> to vector<8x32xf32>
      %47 = arith.addf %44, %46 : vector<8x32xf32>
      %c0_29 = arith.constant 0 : index
      %c0_30 = arith.constant 0 : index
      %48 = vector.load %arg9[%c0_29, %c0_30] : memref<8x32xf32, #tpu.memory_space<vmem>>, vector<8x32xf32>
      tpu.vector_store %arg9[%c0_29, %c0_30], %47 {strides = array<i32>} : memref<8x32xf32, #tpu.memory_space<vmem>>, vector<8x32xf32>,
    } else {
    }
    return
  }
  func.func @transform_0(%arg0: i32, %arg1: i32) -> (i32, i32) {
    %c0_i32 = arith.constant 0 : i32
    %c0_i32_0 = arith.constant 0 : i32
    return %arg0, %c0_i32 : i32, i32
  }
  func.func @transform_1(%arg0: i32, %arg1: i32) -> (i32, i32) {
    %c0_i32 = arith.constant 0 : i32
    %c0_i32_0 = arith.constant 0 : i32
    return %c0_i32, %arg1 : i32, i32
  }
  func.func @transform_2(%arg0: i32, %arg1: i32) -> (i32, i32) {
    %c0_i32 = arith.constant 0 : i32
    %c0_i32_0 = arith.constant 0 : i32
    return %c0_i32, %arg1 : i32, i32
  }
  func.func @transform_3(%arg0: i32, %arg1: i32) -> (i32, i32) {
    %c0_i32 = arith.constant 0 : i32
    %c0_i32_0 = arith.constant 0 : i32
    return %arg1, %c0_i32 : i32, i32
  }
  func.func @transform_4(%arg0: i32, %arg1: i32) -> (i32, i32) {
    %c0_i32 = arith.constant 0 : i32
    %c0_i32_0 = arith.constant 0 : i32
    %c0_i32_1 = arith.constant 0 : i32
    return %c0_i32, %c0_i32_0 : i32, i32
  }
  func.func @transform_5(%arg0: i32, %arg1: i32) -> (i32, i32) {
    %c0_i32 = arith.constant 0 : i32
    %c0_i32_0 = arith.constant 0 : i32
    %c0_i32_1 = arith.constant 0 : i32
    return %c0_i32, %c0_i32_0 : i32, i32
  }
  func.func @transform_6(%arg0: i32, %arg1: i32) -> (i32, i32) {
    %c0_i32 = arith.constant 0 : i32
    %c0_i32_0 = arith.constant 0 : i32
    %c0_i32_1 = arith.constant 0 : i32
    return %c0_i32, %c0_i32_0 : i32, i32
  }
  func.func @transform_7(%arg0: i32, %arg1: i32) -> (i32, i32) {
    %c0_i32 = arith.constant 0 : i32
    %c0_i32_0 = arith.constant 0 : i32
    return %arg0, %c0_i32 : i32, i32
  }
}

</mosaic_0001>

<llo_original>
// kernel: tpu_custom_call.1
$region0: #{tpu_custom_call.1}
  #allocation0 [shape = 'u32[]', space=smem, size = 0x4, offset = 0x4, fixed_abs, tag = 'smem constant byte address 0x4 - core index']
  #allocation1 [shape = 'u32[144,128]{1,0:T(1,128)}', space=vmem, size = 0x12000, scoped, tag = 'internal scratch']
  %s0 = inlined_call_operand.hbm [shape: f32[8,128], index: 0, kind: input, shape index: {}]
  %s1 = inlined_call_operand.hbm [shape: f32[8,128], index: 1, kind: output, shape index: {}]
  %s2 = sld [smem:[#allocation0]]
  $region18: #{tpu_custom_call.1} parent=0
    _
  %s4 = ssub.s32 1, %s2
  %s5 = scalar_select 0, %s4, %s2
  $region1: #{tpu_custom_call.1} parent=0
    #allocation2 [shape = 'u8[4096]{0}', space=vmem, size = 0x1000, scoped, tag = 'input window, operand 0, single buffered']
    #allocation3 [shape = 's32[1]{0}', space=sflag, size = 0x4, scoped, tag = 'scoped memory for tpu_custom_call.1']
    #allocation4 [shape = 's32[1]{0}', space=sflag, size = 0x4, scoped, tag = 'scoped memory for tpu_custom_call.1']
    #allocation5 [shape = 'u8[4096]{0}', space=vmem, size = 0x1000, scoped, tag = 'output window, operand 0, single buffered']
    %6 = vsyncpa [#allocation3], 0
    %7 = vsyncpa [#allocation4], 0
    // Predicated region
    $region2: #{tpu_custom_call.1} parent=1 // pred_check
      _
    $region3: #{tpu_custom_call.1} parent=1 // pred_check_branch
      %9 = sbr.rel (0) target = $region5
    $region4: #{tpu_custom_call.1} parent=1 // pred_region
      %s11 = ssub.s32 128, 128
      %12 = vsyncadd [#allocation3], %s11
      %s14 = sshll.u32 [#allocation2], 4
      %s15 = int_to_ptr.vmem [resolvable:$true] %s14
      %17 = dma.hbm_to_vmem [thread:$0]  %s0, 128, %s15, [#allocation3]
    $region5: #{tpu_custom_call.1} parent=1 // pred_fallthru
      _
    // Predicated region
    $region6: #{tpu_custom_call.1} parent=1 // pred_check
      _
    $region7: #{tpu_custom_call.1} parent=1 // pred_check_branch
      %19 = sbr.rel (0) target = $region9
    $region8: #{tpu_custom_call.1} parent=1 // pred_region
      %20 = dma.done [#allocation3], 128
    $region9: #{tpu_custom_call.1} parent=1 // pred_fallthru
      _
    %v21 = vld [vmem:[#allocation2] sm:$0xff]
    %22 = vst [vmem:[#allocation5] sm:$0xff] %v21
    // Predicated region
    $region10: #{tpu_custom_call.1} parent=1 // pred_check
      _
    $region11: #{tpu_custom_call.1} parent=1 // pred_check_branch
      %24 = sbr.rel (0) target = $region13
    $region12: #{tpu_custom_call.1} parent=1 // pred_region
      %s26 = ssub.s32 128, 128
      %27 = vsyncadd [#allocation4], %s26
      %s29 = sshll.u32 [#allocation5], 4
      %s30 = int_to_ptr.vmem [resolvable:$true] %s29
      %32 = dma.vmem_to_hbm [thread:$0]  %s30, 128, %s1, [#allocation4]
    $region13: #{tpu_custom_call.1} parent=1 // pred_fallthru
      _
    // Predicated region
    $region14: #{tpu_custom_call.1} parent=1 // pred_check
      _
    $region15: #{tpu_custom_call.1} parent=1 // pred_check_branch
      %34 = sbr.rel (0) target = $region17
    $region16: #{tpu_custom_call.1} parent=1 // pred_region
      %35 = dma.done [#allocation4], 128
    $region17: #{tpu_custom_call.1} parent=1 // pred_fallthru
      _
    %36 = vsyncpa [#allocation3], 1
    %37 = vsyncpa [#allocation4], 1

// kernel: tpu_custom_call.1
$region0: #{tpu_custom_call.1}
  #allocation0 [shape = 'u32[]', space=smem, size = 0x4, offset = 0x4, fixed_abs, tag = 'smem constant byte address 0x4 - core index']
  #allocation1 [shape = 'u32[144,128]{1,0:T(1,128)}', space=vmem, size = 0x12000, scoped, tag = 'internal scratch']
  #allocation2 [shape = 'f32[8,32]{1,0:T(8,128)}', space=vmem, size = 0x1000, scoped, tag = 'scratch operand']
  %s0 = inlined_call_operand.vmem [shape: f32[16,32], index: 0, kind: input, shape index: {}]
  %s1 = inlined_call_operand.vmem [shape: f32[32,64], index: 1, kind: input, shape index: {}]
  %s2 = inlined_call_operand.vmem [shape: f32[1,64], index: 2, kind: input, shape index: {}]
  %s3 = inlined_call_operand.vmem [shape: f32[64,32], index: 3, kind: input, shape index: {}]
  %s4 = inlined_call_operand.vmem [shape: f32[1,32], index: 4, kind: input, shape index: {}]
  %s5 = inlined_call_operand.vmem [shape: f32[1,32], index: 5, kind: input, shape index: {}]
  %s6 = inlined_call_operand.vmem [shape: f32[1,32], index: 6, kind: input, shape index: {}]
  %s7 = inlined_call_operand.hbm [shape: f32[16,32], index: 7, kind: output, shape index: {}]
  %s8 = sld [smem:[#allocation0]]
  $region69: #{tpu_custom_call.1} parent=0
    _
  %s10 = ssub.s32 1, %s8
  %s11 = scalar_select 0, %s10, %s8
  $region1: #{tpu_custom_call.1} parent=0
    #allocation3 [shape = 'u8[8192]{0}', space=vmem, size = 0x2000, scoped, tag = 'output window, operand 0']
    #allocation4 [shape = 's32[2]{0}', space=sflag, size = 0x8, scoped, tag = 'scoped memory for tpu_custom_call.1']
    %12 = vsyncpa [#allocation4], 0
    %s13 = scalar_lea.sflag [#allocation4], 1
    %14 = vsyncpa %s13, 0
    loop: start=0, step=1, limit=4
    $region2: #{tpu_custom_call.1} parent=1 // loop_pre_header
      _
    $region3: #{tpu_custom_call.1} parent=1 // loop_header
      %s16 = sphi 0, %s20
      %p17 = scmp.ge.s32.totalorder %s16, 4
      %s23 = sphi 0, %s35
      %s24 = sphi 0, %s31
      %s25 = sphi 0, %s23
      %s26 = sphi 0, %s24
      %s27 = sphi 0, %s25
      %s28 = sphi 0, %s26
      %s38 = sphi 0, %s40
      %s41 = sphi 0, %s38
      %s42 = sphi 0, %s41
      %s58 = sphi 0, %s42
      %s64 = sphi 0, %s66
      %s67 = sphi 0, %s64
      %s68 = sphi 0, %s67
      %s84 = sphi 0, %s68
      %s90 = sphi 0, %s92
      %s93 = sphi 0, %s90
      %s94 = sphi 0, %s93
      %s110 = sphi 0, %s94
      %s116 = sphi 0, %s118
      %s119 = sphi 0, %s116
      %s120 = sphi 0, %s119
      %s136 = sphi 0, %s120
      %s140 = sphi 0, %s140
      %s142 = sphi 0, %s140
      %s143 = sphi 0, %s142
      %s157 = sphi 0, %s143
      %s161 = sphi 0, %s161
      %s163 = sphi 0, %s161
      %s164 = sphi 0, %s163
      %s178 = sphi 0, %s164
      %s182 = sphi 0, %s182
      %s184 = sphi 0, %s182
      %s185 = sphi 0, %s184
      %s199 = sphi 0, %s185
      %s205 = sphi 0, %s207
      %s208 = sphi 0, %s205
      %s209 = sphi 0, %s208
      %s225 = sphi 0, %s209
    $region4: #{tpu_custom_call.1} parent=1 // loop_header_branch
      %19 = sbr.rel (%p17) target = $region8
    $region5: #{tpu_custom_call.1} parent=1 // loop_body
      %s21 = ssub.s32 %s16, 1
      %s22 = ssub.s32 %s16, 2
      %s29 = sadd.s32 1, %s24
      %p30 = scmp.ge.s32.totalorder %s29, 1
      %s31 = scalar_select %p30, 0, %s29
      %s32 = sadd.s32 1, %s23
      %s33 = scalar_select %p30, %s32, %s23
      %p34 = scmp.ge.s32.totalorder %s33, 2
      %s35 = scalar_select %p34, 0, %s33
      %s36 = ssub.s32 %s23, %s35
      %p37 = scmp.eq.s32.totalorder %s36, 0
      %s39 = sadd.s32 %s38, 1
      %s40 = scalar_select %p37, %s38, %s39
      %p43 = pneg %p37
      %p44 = scmp.eq.s32.totalorder %s16, 1
      %p45 = por %p43, %p44
      %p46 = scmp.ne.s32.totalorder %s38, %s41
      %p47 = scmp.eq.s32.totalorder %s16, 0
      %p48 = por %p46, %p47
      %p49 = scmp.ne.s32.totalorder %s38, %s41
      %p50 = scmp.eq.s32.totalorder %s21, 1
      %p51 = por %p49, %p50
      %p52 = scmp.ne.s32.totalorder %s41, %s42
      %p53 = scmp.eq.s32.totalorder %s21, 0
      %p54 = por %p52, %p53
      %p55 = scmp.ne.s32.totalorder %s41, %s42
      %p56 = scmp.eq.s32.totalorder %s22, 1
      %p57 = por %p55, %p56
      %p59 = scmp.ne.s32.totalorder %s42, %s58
      %p60 = scmp.eq.s32.totalorder %s22, 0
      %p61 = por %p59, %p60
      %s62 = ssub.s32 %s24, %s31
      %p63 = scmp.eq.s32.totalorder %s62, 0
      %s65 = sadd.s32 %s64, 1
      %s66 = scalar_select %p63, %s64, %s65
      %p69 = pneg %p63
      %p70 = scmp.eq.s32.totalorder %s16, 1
      %p71 = por %p69, %p70
      %p72 = scmp.ne.s32.totalorder %s64, %s67
      %p73 = scmp.eq.s32.totalorder %s16, 0
      %p74 = por %p72, %p73
      %p75 = scmp.ne.s32.totalorder %s64, %s67
      %p76 = scmp.eq.s32.totalorder %s21, 1
      %p77 = por %p75, %p76
      %p78 = scmp.ne.s32.totalorder %s67, %s68
      %p79 = scmp.eq.s32.totalorder %s21, 0
      %p80 = por %p78, %p79
      %p81 = scmp.ne.s32.totalorder %s67, %s68
      %p82 = scmp.eq.s32.totalorder %s22, 1
      %p83 = por %p81, %p82
      %p85 = scmp.ne.s32.totalorder %s68, %s84
      %p86 = scmp.eq.s32.totalorder %s22, 0
      %p87 = por %p85, %p86
      %s88 = ssub.s32 %s24, %s31
      %p89 = scmp.eq.s32.totalorder %s88, 0
      %s91 = sadd.s32 %s90, 1
      %s92 = scalar_select %p89, %s90, %s91
      %p95 = pneg %p89
      %p96 = scmp.eq.s32.totalorder %s16, 1
      %p97 = por %p95, %p96
      %p98 = scmp.ne.s32.totalorder %s90, %s93
      %p99 = scmp.eq.s32.totalorder %s16, 0
      %p100 = por %p98, %p99
      %p101 = scmp.ne.s32.totalorder %s90, %s93
      %p102 = scmp.eq.s32.totalorder %s21, 1
      %p103 = por %p101, %p102
      %p104 = scmp.ne.s32.totalorder %s93, %s94
      %p105 = scmp.eq.s32.totalorder %s21, 0
      %p106 = por %p104, %p105
      %p107 = scmp.ne.s32.totalorder %s93, %s94
      %p108 = scmp.eq.s32.totalorder %s22, 1
      %p109 = por %p107, %p108
      %p111 = scmp.ne.s32.totalorder %s94, %s110
      %p112 = scmp.eq.s32.totalorder %s22, 0
      %p113 = por %p111, %p112
      %s114 = ssub.s32 %s24, %s31
      %p115 = scmp.eq.s32.totalorder %s114, 0
      %s117 = sadd.s32 %s116, 1
      %s118 = scalar_select %p115, %s116, %s117
      %p121 = pneg %p115
      %p122 = scmp.eq.s32.totalorder %s16, 1
      %p123 = por %p121, %p122
      %p124 = scmp.ne.s32.totalorder %s116, %s119
      %p125 = scmp.eq.s32.totalorder %s16, 0
      %p126 = por %p124, %p125
      %p127 = scmp.ne.s32.totalorder %s116, %s119
      %p128 = scmp.eq.s32.totalorder %s21, 1
      %p129 = por %p127, %p128
      %p130 = scmp.ne.s32.totalorder %s119, %s120
      %p131 = scmp.eq.s32.totalorder %s21, 0
      %p132 = por %p130, %p131
      %p133 = scmp.ne.s32.totalorder %s119, %s120
      %p134 = scmp.eq.s32.totalorder %s22, 1
      %p135 = por %p133, %p134
      %p137 = scmp.ne.s32.totalorder %s120, %s136
      %p138 = scmp.eq.s32.totalorder %s22, 0
      %p139 = por %p137, %p138
      %s141 = sadd.s32 %s140, 1
      %p144 = scmp.eq.s32.totalorder %s16, 1
      %p145 = scmp.ne.s32.totalorder %s140, %s142
      %p146 = scmp.eq.s32.totalorder %s16, 0
      %p147 = por %p145, %p146
      %p148 = scmp.ne.s32.totalorder %s140, %s142
      %p149 = scmp.eq.s32.totalorder %s21, 1
      %p150 = por %p148, %p149
      %p151 = scmp.ne.s32.totalorder %s142, %s143
      %p152 = scmp.eq.s32.totalorder %s21, 0
      %p153 = por %p151, %p152
      %p154 = scmp.ne.s32.totalorder %s142, %s143
      %p155 = scmp.eq.s32.totalorder %s22, 1
      %p156 = por %p154, %p155
      %p158 = scmp.ne.s32.totalorder %s143, %s157
      %p159 = scmp.eq.s32.totalorder %s22, 0
      %p160 = por %p158, %p159
      %s162 = sadd.s32 %s161, 1
      %p165 = scmp.eq.s32.totalorder %s16, 1
      %p166 = scmp.ne.s32.totalorder %s161, %s163
      %p167 = scmp.eq.s32.totalorder %s16, 0
      %p168 = por %p166, %p167
      %p169 = scmp.ne.s32.totalorder %s161, %s163
      %p170 = scmp.eq.s32.totalorder %s21, 1
      %p171 = por %p169, %p170
      %p172 = scmp.ne.s32.totalorder %s163, %s164
      %p173 = scmp.eq.s32.totalorder %s21, 0
      %p174 = por %p172, %p173
      %p175 = scmp.ne.s32.totalorder %s163, %s164
      %p176 = scmp.eq.s32.totalorder %s22, 1
      %p177 = por %p175, %p176
      %p179 = scmp.ne.s32.totalorder %s164, %s178
      %p180 = scmp.eq.s32.totalorder %s22, 0
      %p181 = por %p179, %p180
      %s183 = sadd.s32 %s182, 1
      %p186 = scmp.eq.s32.totalorder %s16, 1
      %p187 = scmp.ne.s32.totalorder %s182, %s184
      %p188 = scmp.eq.s32.totalorder %s16, 0
      %p189 = por %p187, %p188
      %p190 = scmp.ne.s32.totalorder %s182, %s184
      %p191 = scmp.eq.s32.totalorder %s21, 1
      %p192 = por %p190, %p191
      %p193 = scmp.ne.s32.totalorder %s184, %s185
      %p194 = scmp.eq.s32.totalorder %s21, 0
      %p195 = por %p193, %p194
      %p196 = scmp.ne.s32.totalorder %s184, %s185
      %p197 = scmp.eq.s32.totalorder %s22, 1
      %p198 = por %p196, %p197
      %p200 = scmp.ne.s32.totalorder %s185, %s199
      %p201 = scmp.eq.s32.totalorder %s22, 0
      %p202 = por %p200, %p201
      %s203 = ssub.s32 %s23, %s35
      %p204 = scmp.eq.s32.totalorder %s203, 0
      %s206 = sadd.s32 %s205, 1
      %s207 = scalar_select %p204, %s205, %s206
      %p210 = pneg %p204
      %p211 = scmp.eq.s32.totalorder %s16, 1
      %p212 = por %p210, %p211
      %p213 = scmp.ne.s32.totalorder %s205, %s208
      %p214 = scmp.eq.s32.totalorder %s16, 0
      %p215 = por %p213, %p214
      %p216 = scmp.ne.s32.totalorder %s205, %s208
      %p217 = scmp.eq.s32.totalorder %s21, 1
      %p218 = por %p216, %p217
      %p219 = scmp.ne.s32.totalorder %s208, %s209
      %p220 = scmp.eq.s32.totalorder %s21, 0
      %p221 = por %p219, %p220
      %p222 = scmp.ne.s32.totalorder %s208, %s209
      %p223 = scmp.eq.s32.totalorder %s22, 1
      %p224 = por %p222, %p223
      %p226 = scmp.ne.s32.totalorder %s209, %s225
      %p227 = scmp.eq.s32.totalorder %s22, 0
      %p228 = por %p226, %p227
      %p229 = scmp.le.s32.totalorder 1, %s16
      %p230 = scmp.lt.s32.totalorder %s16, 3
      %p231 = pnand %p229, %p230
      %p232 = pneg %p231
      // Predicated region
      $region9: #{tpu_custom_call.1} parent=5 // pred_check
        _
      $region10: #{tpu_custom_call.1} parent=5 // pred_check_branch
        %234 = sbr.rel (%p231) target = $region12
      $region11: #{tpu_custom_call.1} parent=5 // pred_region
        %s235 = ssub.s32 %s16, 1
        // Predicated region
        $region13: #{tpu_custom_call.1} parent=11 // pred_check
          %p236 = pneg %p80
        $region14: #{tpu_custom_call.1} parent=11 // pred_check_branch
          %238 = sbr.rel (%p236) target = $region16
        $region15: #{tpu_custom_call.1} parent=11 // pred_region
          %p239 = scmp.lt.s32.totalorder %s26, 0
          %s240 = scalar_select %p239, %s26, 0
          %s241 = smul.addr %s240, 8
          %s242 = scalar_lea.vmem %s1, %s241
        $region16: #{tpu_custom_call.1} parent=11 // pred_fallthru
          _
        // Predicated region
        $region17: #{tpu_custom_call.1} parent=11 // pred_check
          %p243 = pneg %p106
        $region18: #{tpu_custom_call.1} parent=11 // pred_check_branch
          %245 = sbr.rel (%p243) target = $region20
        $region19: #{tpu_custom_call.1} parent=11 // pred_region
          %p246 = scmp.lt.s32.totalorder %s26, 0
          %s247 = scalar_select %p246, %s26, 0
          %s248 = scalar_lea.vmem %s2, %s247
        $region20: #{tpu_custom_call.1} parent=11 // pred_fallthru
          _
        // Predicated region
        $region21: #{tpu_custom_call.1} parent=11 // pred_check
          %p249 = pneg %p132
        $region22: #{tpu_custom_call.1} parent=11 // pred_check_branch
          %251 = sbr.rel (%p249) target = $region24
        $region23: #{tpu_custom_call.1} parent=11 // pred_region
          %s252 = smul.u32 8, %s26
          %p253 = scmp.lt.s32.totalorder %s252, 7
          %s254 = scalar_select %p253, %s252, 7
          %s255 = smul.addr %s254, 8
          %s256 = scalar_lea.vmem %s3, %s255
          %s257 = smul.u32 8, %s26
        $region24: #{tpu_custom_call.1} parent=11 // pred_fallthru
          _
        // Predicated region
        $region25: #{tpu_custom_call.1} parent=11 // pred_check
          %p258 = pneg %p153
        $region26: #{tpu_custom_call.1} parent=11 // pred_check_branch
          %260 = sbr.rel (%p258) target = $region28
        $region27: #{tpu_custom_call.1} parent=11 // pred_region
          _
        $region28: #{tpu_custom_call.1} parent=11 // pred_fallthru
          _
        // Predicated region
        $region29: #{tpu_custom_call.1} parent=11 // pred_check
          %p261 = pneg %p174
        $region30: #{tpu_custom_call.1} parent=11 // pred_check_branch
          %263 = sbr.rel (%p261) target = $region32
        $region31: #{tpu_custom_call.1} parent=11 // pred_region
          _
        $region32: #{tpu_custom_call.1} parent=11 // pred_fallthru
          _
        // Predicated region
        $region33: #{tpu_custom_call.1} parent=11 // pred_check
          %p264 = pneg %p195
        $region34: #{tpu_custom_call.1} parent=11 // pred_check_branch
          %266 = sbr.rel (%p264) target = $region36
        $region35: #{tpu_custom_call.1} parent=11 // pred_region
          _
        $region36: #{tpu_custom_call.1} parent=11 // pred_fallthru
          _
      $region12: #{tpu_custom_call.1} parent=5 // pred_fallthru
        _
      %p267 = scmp.lt.s32.totalorder %s16, 2
      // Predicated region
      $region37: #{tpu_custom_call.1} parent=5 // pred_check
        %p268 = pneg %p267
      $region38: #{tpu_custom_call.1} parent=5 // pred_check_branch
        %270 = sbr.rel (%p268) target = $region40
      $region39: #{tpu_custom_call.1} parent=5 // pred_region
        // Predicated region
        $region41: #{tpu_custom_call.1} parent=39 // pred_check
          %p271 = pneg %p48
        $region42: #{tpu_custom_call.1} parent=39 // pred_check_branch
          %273 = sbr.rel (%p271) target = $region44
        $region43: #{tpu_custom_call.1} parent=39 // pred_region
          %p274 = scmp.lt.s32.totalorder %s23, 1
          %s275 = scalar_select %p274, %s23, 1
          %s276 = smul.addr %s275, 8
          %s277 = scalar_lea.vmem %s0, %s276
        $region44: #{tpu_custom_call.1} parent=39 // pred_fallthru
          _
      $region40: #{tpu_custom_call.1} parent=5 // pred_fallthru
        _
      %p278 = scmp.le.s32.totalorder 1, %s16
      %p279 = scmp.lt.s32.totalorder %s16, 3
      %p280 = pnand %p278, %p279
      %p281 = pneg %p280
      // Predicated region
      $region45: #{tpu_custom_call.1} parent=5 // pred_check
        _
      $region46: #{tpu_custom_call.1} parent=5 // pred_check_branch
        %283 = sbr.rel (%p280) target = $region48
      $region47: #{tpu_custom_call.1} parent=5 // pred_region
        %s284 = ssub.s32 %s16, 1
        %p285 = scmp.lt.s32.totalorder %s25, 1
        %s286 = scalar_select %p285, %s25, 1
        %s287 = smul.addr %s286, 8
        %s288 = scalar_lea.vmem %s0, %s287
        %p289 = pneg %p54
        %p290 = pneg %p51
        %p291 = scmp.lt.s32.totalorder %s26, 0
        %s292 = scalar_select %p291, %s26, 0
        %s293 = smul.addr %s292, 8
        %s294 = scalar_lea.vmem %s1, %s293
        %p295 = pneg %p80
        %p296 = pneg %p77
        %p297 = scmp.lt.s32.totalorder %s26, 0
        %s298 = scalar_select %p297, %s26, 0
        %s299 = scalar_lea.vmem %s2, %s298
        %p300 = pneg %p106
        %p301 = pneg %p103
        %s302 = smul.u32 8, %s26
        %p303 = scmp.lt.s32.totalorder %s302, 7
        %s304 = scalar_select %p303, %s302, 7
        %s305 = smul.addr %s304, 8
        %s306 = scalar_lea.vmem %s3, %s305
        %p307 = pneg %p132
        %p308 = pneg %p129
        %p309 = pneg %p153
        %p310 = pneg %p150
        %p311 = pneg %p174
        %p312 = pneg %p171
        %p313 = pneg %p195
        %p314 = pneg %p192
        %p315 = pneg %p221
        %p316 = pneg %p218
        %s317 = sand.u32 %s208, 1
        %s318 = scalar_lea.sflag [#allocation4], %s317
        %s319 = sand.u32 %s208, 1
        %s320 = smul.addr %s319, 8
        %s321 = scalar_lea.vmem [#allocation3], %s320
        %p322 = scmp.lt.s32.totalorder %s25, 1
        %s323 = scalar_select %p322, %s25, 1
        %s324 = smul.addr %s323, 8
        %s325 = scalar_lea.vmem %s0, %s324
        %p326 = scmp.lt.s32.totalorder %s26, 0
        %s327 = scalar_select %p326, %s26, 0
        %s328 = smul.addr %s327, 8
        %s329 = scalar_lea.vmem %s1, %s328
        %p330 = scmp.lt.s32.totalorder %s26, 0
        %s331 = scalar_select %p330, %s26, 0
        %s332 = scalar_lea.vmem %s2, %s331
        %s333 = smul.u32 8, %s26
        %p334 = scmp.lt.s32.totalorder %s333, 7
        %s335 = scalar_select %p334, %s333, 7
        %s336 = smul.addr %s335, 8
        %s337 = scalar_lea.vmem %s3, %s336
        %s338 = smul.u32 8, %s26
        %p339 = scmp.eq.s32.totalorder %s26, 0
        // Predicated region
        $region49: #{tpu_custom_call.1} parent=47 // pred_check
          %p340 = pneg %p339
        $region50: #{tpu_custom_call.1} parent=47 // pred_check_branch
          %342 = sbr.rel (%p340) target = $region52
        $region51: #{tpu_custom_call.1} parent=47 // pred_region
          %vm343 = vcmask 261120
          %344 = vst.msk [vmem:[#allocation2] sm:$0xff] %vm343, 0.0
        $region52: #{tpu_custom_call.1} parent=47 // pred_fallthru
          _
        %v345 = vld [vmem:[%s325] sm:$0xff]
        %v346 = vld [vmem:[%s329] sm:$0xff]
        %v347 = vld [vmem:[%s329 + $0x8] sm:$0xff]
        %v348 = vld [vmem:[%s329 + $0x10] sm:$0xff]
        %v349 = vld [vmem:[%s329 + $0x18] sm:$0xff]
        %v350 = vld [vmem:[%s332] sm:$0x1]
        %v352 = vlaneseq
        %v353 = vshrl.u32 %v352, 7
        %v354 = vsub.s32 0, %v353
        %v355 = vrot.slane %v350, %v354
        %vm357 = vcmask 261120
        %v359 = vsel %vm357, %v345, 0
        %361 = vmatprep.subr.mxu0 0.0
        %362 = vmatpush1.msra.mxu0 %v346
        %363 = vmatprep.subr.mxu0 0.0
        %364 = vmatpush1.msra.mxu0 %v347
        %365 = vmatprep.subr.mxu0 0.0
        %366 = vmatpush1.msra.mxu0 %v348
        %367 = vmatprep.subr.mxu0 0.0
        %368 = vmatpush1.msra.mxu0 %v349
        %369 = vmatprep.subr.mxu0 0.0
        %370 = vmatpush1.msra.mxu0 0.0
        %371 = vmatprep.subr.mxu0 0.0
        %372 = vmatpush1.msra.mxu0 0.0
        %373 = vmatprep.subr.mxu0 0.0
        %374 = vmatpush1.msra.mxu0 0.0
        %375 = vmatprep.subr.mxu0 0.0
        %376 = vmatpush1.msra.mxu0 0.0
        %377 = vmatprep.subr.mxu0 0.0
        %378 = vmatpush1.msra.mxu0 0.0
        %379 = vmatprep.subr.mxu0 0.0
        %380 = vmatpush1.msra.mxu0 0.0
        %381 = vmatprep.subr.mxu0 0.0
        %382 = vmatpush1.msra.mxu0 0.0
        %383 = vmatprep.subr.mxu0 0.0
        %384 = vmatpush1.msra.mxu0 0.0
        %385 = vmatprep.subr.mxu0 0.0
        %386 = vmatpush1.msra.mxu0 0.0
        %387 = vmatprep.subr.mxu0 0.0
        %388 = vmatpush1.msra.mxu0 0.0
        %389 = vmatprep.subr.mxu0 0.0
        %390 = vmatpush1.msra.mxu0 0.0
        %391 = vmatprep.subr.mxu0 0.0
        %392 = vmatpush1.msra.mxu0 0.0
        %393 = vmatprep.subr.mxu0 0.0
        %394 = vmatpush1.msra.mxu0 0.0
        %395 = vmatprep.subr.mxu0 0.0
        %396 = vmatpush1.msra.mxu0 0.0
        %397 = vmatprep.subr.mxu0 0.0
        %398 = vmatpush1.msra.mxu0 0.0
        %399 = vmatprep.subr.mxu0 0.0
        %400 = vmatpush1.msra.mxu0 0.0
        %401 = vmatprep.subr.mxu0 0.0
        %402 = vmatpush1.msra.mxu0 0.0
        %403 = vmatprep.subr.mxu0 0.0
        %404 = vmatpush1.msra.mxu0 0.0
        %405 = vmatprep.subr.mxu0 0.0
        %406 = vmatpush1.msra.mxu0 0.0
        %407 = vmatprep.subr.mxu0 0.0
        %408 = vmatpush1.msra.mxu0 0.0
        %409 = vmatprep.subr.mxu0 0.0
        %410 = vmatpush1.msra.mxu0 0.0
        %411 = vmatprep.subr.mxu0 0.0
        %412 = vmatpush1.msra.mxu0 0.0
        %413 = vmatprep.subr.mxu0 0.0
        %414 = vmatpush1.msra.mxu0 0.0
        %415 = vmatprep.subr.mxu0 0.0
        %416 = vmatpush1.msra.mxu0 0.0
        %417 = vmatprep.subr.mxu0 0.0
        %418 = vmatpush1.msra.mxu0 0.0
        %419 = vmatprep.subr.mxu0 0.0
        %420 = vmatpush1.msra.mxu0 0.0
        %421 = vmatprep.subr.mxu0 0.0
        %422 = vmatpush1.msra.mxu0 0.0
        %423 = vmatprep.subr.mxu0 0.0
        %424 = vmatpush1.msra.mxu0 0.0
        %425 = vmatprep.mubr.f32.mxu0 0.0
        %426 = vmatmul.mubr.f32.gmra.mrb[0].mxu0 %v359
        %v427 = vpop.f32.mrb[0].mxu0
        %v428 = vadd.f32 %v355, %v427
        %v429 = vpop.f32.mrb[0].mxu0
        %430 = vdwg.mxu0
        %v431 = vmax.f32 %v428, 0.0
        %v432 = vld [vmem:[#allocation2] sm:$0xff]
        %v433 = vld [vmem:[%s337] sm:$0xff]
        %v434 = vld [vmem:[%s337 + $0x8] sm:$0xff]
        %v435 = vld [vmem:[%s337 + $0x10] sm:$0xff]
        %v436 = vld [vmem:[%s337 + $0x18] sm:$0xff]
        %v437 = vld [vmem:[%s337 + $0x20] sm:$0xff]
        %v438 = vld [vmem:[%s337 + $0x28] sm:$0xff]
        %v439 = vld [vmem:[%s337 + $0x30] sm:$0xff]
        %v440 = vld [vmem:[%s337 + $0x38] sm:$0xff]
        %vm441 = vcmask 523264
        %v443 = vsel %vm441, %v431, 0
        %445 = vmatprep.subr.mxu0 0.0
        %446 = vmatpush1.msra.mxu0 %v433
        %447 = vmatprep.subr.mxu0 0.0
        %448 = vmatpush1.msra.mxu0 %v434
        %449 = vmatprep.subr.mxu0 0.0
        %450 = vmatpush1.msra.mxu0 %v435
        %451 = vmatprep.subr.mxu0 0.0
        %452 = vmatpush1.msra.mxu0 %v436
        %453 = vmatprep.subr.mxu0 0.0
        %454 = vmatpush1.msra.mxu0 %v437
        %455 = vmatprep.subr.mxu0 0.0
        %456 = vmatpush1.msra.mxu0 %v438
        %457 = vmatprep.subr.mxu0 0.0
        %458 = vmatpush1.msra.mxu0 %v439
        %459 = vmatprep.subr.mxu0 0.0
        %460 = vmatpush1.msra.mxu0 %v440
        %461 = vmatprep.subr.mxu0 0.0
        %462 = vmatpush1.msra.mxu0 0.0
        %463 = vmatprep.subr.mxu0 0.0
        %464 = vmatpush1.msra.mxu0 0.0
        %465 = vmatprep.subr.mxu0 0.0
        %466 = vmatpush1.msra.mxu0 0.0
        %467 = vmatprep.subr.mxu0 0.0
        %468 = vmatpush1.msra.mxu0 0.0
        %469 = vmatprep.subr.mxu0 0.0
        %470 = vmatpush1.msra.mxu0 0.0
        %471 = vmatprep.subr.mxu0 0.0
        %472 = vmatpush1.msra.mxu0 0.0
        %473 = vmatprep.subr.mxu0 0.0
        %474 = vmatpush1.msra.mxu0 0.0
        %475 = vmatprep.subr.mxu0 0.0
        %476 = vmatpush1.msra.mxu0 0.0
        %477 = vmatprep.subr.mxu0 0.0
        %478 = vmatpush1.msra.mxu0 0.0
        %479 = vmatprep.subr.mxu0 0.0
        %480 = vmatpush1.msra.mxu0 0.0
        %481 = vmatprep.subr.mxu0 0.0
        %482 = vmatpush1.msra.mxu0 0.0
        %483 = vmatprep.subr.mxu0 0.0
        %484 = vmatpush1.msra.mxu0 0.0
        %485 = vmatprep.subr.mxu0 0.0
        %486 = vmatpush1.msra.mxu0 0.0
        %487 = vmatprep.subr.mxu0 0.0
        %488 = vmatpush1.msra.mxu0 0.0
        %489 = vmatprep.subr.mxu0 0.0
        %490 = vmatpush1.msra.mxu0 0.0
        %491 = vmatprep.subr.mxu0 0.0
        %492 = vmatpush1.msra.mxu0 0.0
        %493 = vmatprep.subr.mxu0 0.0
        %494 = vmatpush1.msra.mxu0 0.0
        %495 = vmatprep.subr.mxu0 0.0
        %496 = vmatpush1.msra.mxu0 0.0
        %497 = vmatprep.subr.mxu0 0.0
        %498 = vmatpush1.msra.mxu0 0.0
        %499 = vmatprep.subr.mxu0 0.0
        %500 = vmatpush1.msra.mxu0 0.0
        %501 = vmatprep.subr.mxu0 0.0
        %502 = vmatpush1.msra.mxu0 0.0
        %503 = vmatprep.subr.mxu0 0.0
        %504 = vmatpush1.msra.mxu0 0.0
        %505 = vmatprep.subr.mxu0 0.0
        %506 = vmatpush1.msra.mxu0 0.0
        %507 = vmatprep.subr.mxu0 0.0
        %508 = vmatpush1.msra.mxu0 0.0
        %509 = vmatprep.mubr.f32.mxu0 0.0
        %510 = vmatmul.mubr.f32.gmra.mrb[0].mxu0 %v443
        %v511 = vpop.f32.mrb[0].mxu0
        %v512 = vadd.f32 0.0, %v511
        %v513 = vpop.f32.mrb[0].mxu0
        %514 = vdwg.mxu0
        %v515 = vadd.f32 %v432, %v512
        %516 = vst.msk [vmem:[#allocation2] sm:$0xff] %vm357, %v515
        // Predicated region
        $region53: #{tpu_custom_call.1} parent=47 // pred_check
          %p517 = pneg %p339
        $region54: #{tpu_custom_call.1} parent=47 // pred_check_branch
          %519 = sbr.rel (%p517) target = $region56
        $region55: #{tpu_custom_call.1} parent=47 // pred_region
          %v520 = vld [vmem:[#allocation2] sm:$0xff]
          %v521 = vld [vmem:[%s4] sm:$0x1]
          %v523 = vlaneseq
          %v524 = vshrl.u32 %v523, 7
          %v525 = vsub.s32 0, %v524
          %v526 = vrot.slane %v521, %v525
          %v528 = vadd.f32 %v520, %v526
          %v529 = vadd.f32 %v528, %v345
          %v530 = vsel %vm357, %v529, 0.0
          %531 = vadd.xlane.f32.xlu0 %v530
          %v532 = vpop.xlane.xlu0 %531
          %v533 = vmul.f32 %v532, 0.03125
          %v534 = vmul.f32 %v529, %v529
          %v535 = vsel %vm357, %v534, 0.0
          %536 = vadd.xlane.f32.xlu0 %v535
          %v537 = vpop.xlane.xlu0 %536
          %v538 = vmul.f32 %v537, 0.03125
          %v539 = vmul.f32 %v533, %v533
          %v540 = vsub.f32 %v538, %v539
          %v541 = vsub.f32 %v529, %v533
          %v542 = vadd.f32 %v540, 1e-06
          %v543 = vrsqrt.pop %v542
          %v544 = vmul.f32 %v541, %v543
          %v545 = vld [vmem:[%s5] sm:$0x1]
          %v547 = vlaneseq
          %v548 = vshrl.u32 %v547, 7
          %v549 = vsub.s32 0, %v548
          %v550 = vrot.slane %v545, %v549
          %v552 = vmul.f32 %v544, %v550
          %v553 = vld [vmem:[%s6] sm:$0x1]
          %v555 = vlaneseq
          %v556 = vshrl.u32 %v555, 7
          %v557 = vsub.s32 0, %v556
          %v558 = vrot.slane %v553, %v557
          %v560 = vadd.f32 %v552, %v558
          %561 = vst.msk [vmem:[%s321] sm:$0xff] %vm357, %v560
        $region56: #{tpu_custom_call.1} parent=47 // pred_fallthru
          _
        %s562 = sand.u32 %s208, 1
        %s563 = scalar_lea.sflag [#allocation4], %s562
        %s564 = sand.u32 %s208, 1
        %s565 = smul.addr %s564, 8
        %s566 = scalar_lea.vmem [#allocation3], %s565
        // Predicated region
        $region57: #{tpu_custom_call.1} parent=47 // pred_check
          %p567 = pneg %p218
        $region58: #{tpu_custom_call.1} parent=47 // pred_check_branch
          %569 = sbr.rel (%p567) target = $region60
        $region59: #{tpu_custom_call.1} parent=47 // pred_region
          %s571 = ssub.s32 128, 128
          %572 = vsyncadd %s563, %s571
          %s573 = smul.addr %s25, 128
          %s574 = scalar_lea.hbm %s7, %s573
          %s576 = sshll.u32 %s566, 4
          %s577 = int_to_ptr.vmem [resolvable:$true] %s576
          %579 = dma.vmem_to_hbm [thread:$0]  %s577, 128, %s574, %s563
        $region60: #{tpu_custom_call.1} parent=47 // pred_fallthru
          _
      $region48: #{tpu_custom_call.1} parent=5 // pred_fallthru
        _
      %p580 = scmp.le.s32.totalorder 2, %s16
      // Predicated region
      $region61: #{tpu_custom_call.1} parent=5 // pred_check
        %p581 = pneg %p580
      $region62: #{tpu_custom_call.1} parent=5 // pred_check_branch
        %583 = sbr.rel (%p581) target = $region64
      $region63: #{tpu_custom_call.1} parent=5 // pred_region
        %s584 = ssub.s32 %s16, 2
        // Predicated region
        $region65: #{tpu_custom_call.1} parent=63 // pred_check
          %p585 = pneg %p224
        $region66: #{tpu_custom_call.1} parent=63 // pred_check_branch
          %587 = sbr.rel (%p585) target = $region68
        $region67: #{tpu_custom_call.1} parent=63 // pred_region
          %s588 = sand.u32 %s209, 1
          %s589 = scalar_lea.sflag [#allocation4], %s588
          %s590 = sand.u32 %s209, 1
          %s591 = smul.addr %s590, 8
          %s592 = scalar_lea.vmem [#allocation3], %s591
          %593 = dma.done %s589, 128
        $region68: #{tpu_custom_call.1} parent=63 // pred_fallthru
          _
      $region64: #{tpu_custom_call.1} parent=5 // pred_fallthru
        _
    $region6: #{tpu_custom_call.1} parent=1 // loop_footer
      %s20 = sadd.s32 1, %s16
    $region7: #{tpu_custom_call.1} parent=1 // loop_footer_branch
      %15 = sbr.rel target = $region3
    $region8: #{tpu_custom_call.1} parent=1 // loop_exit
      _
    %594 = vsyncpa [#allocation4], 1
    %s595 = scalar_lea.sflag [#allocation4], 1
    %596 = vsyncpa %s595, 1

</llo_original>
